<compile_context>
chip_gen: v7x
topology: tpu7x:2x2x1
jax: 0.10.0
libtpu: 0.0.40
codegen_flags: <defaults>
</compile_context>

<pallas_src>
import numpy as np
import jax
import jax.numpy as jnp
from jax.experimental import pallas as pl
from jax.experimental.pallas import tpu as pltpu


def make_positional_encoding_buffer(d_model: int, max_len: int) -> jnp.ndarray:
    """Deterministic sinusoidal PE buffer, same math as the PyTorch __init__."""
    position = np.arange(0, max_len, dtype=np.float32)[:, None]            # (max_len, 1)
    div_term = np.exp(np.arange(0, d_model, 2, dtype=np.float32)
                      * (-np.log(10000.0) / d_model))                      # (d_model/2,)
    pe = np.zeros((max_len, d_model), dtype=np.float32)
    pe[:, 0::2] = np.sin(position * div_term)
    pe[:, 1::2] = np.cos(position * div_term)
    return jnp.asarray(pe[None, :, :])                                     # (1, max_len, d_model)


def _pos_enc_kernel(x_ref, pe_ref, o_ref):
    # x_ref / o_ref: (bt, row_tile, W); pe_ref: (row_tile, W) — broadcast over
    # the leading batch-block dim on the VPU.  Purely HBM-bound elementwise add.
    o_ref[...] = x_ref[...] + pe_ref[...]


def _round_up(v: int, m: int) -> int:
    return -(-v // m) * m


def _pick_lane_width(total: int, max_w: int = 2048) -> int:
    """Largest multiple of 128 that divides `total` and is <= max_w (0 if none)."""
    if total % 128 != 0:
        return 0
    best, cand = 0, 128
    limit = min(total, max_w)
    while cand <= limit:
        if total % cand == 0:
            best = cand
        cand += 128
    return best


def positional_encoding_forward(x: jnp.ndarray, pe: jnp.ndarray,
                                *, target_bytes: int = 4 << 20) -> jnp.ndarray:
    """x: (B, S, D); pe: (1, max_len, D). Returns x + pe[:, :S, :]."""
    B, S, D = x.shape
    assert pe.shape[0] == 1 and pe.shape[2] == D and pe.shape[1] >= S

    total = S * D
    itemsize = jnp.dtype(x.dtype).itemsize
    sub = max(8, 32 // itemsize)            # sublane multiple: 8 f32, 16 bf16, 32 int8

    W = _pick_lane_width(total)
    if W:
        # Main path: fused (S*D) axis reshaped to (R, W), lane axis fully dense.
        R = total // W
        x3 = x.reshape(B, R, W)
        pe2 = pe[0, :S, :].astype(x.dtype).reshape(R, W)
    else:
        # Fallback (S*D not 128-aligned): keep (B, S, D); lane axis = full D
        # (legal for any D), bounded tiles along the sequence axis.
        R, W = S, D
        x3 = x
        pe2 = pe[0, :S, :].astype(x.dtype)

    # VMEM footprints use padded dims (lanes pad to 128, sublanes to `sub`).
    W_vmem = _round_up(W, 128)
    row_vmem_bytes = _round_up(R, sub) * W_vmem * itemsize   # one full batch row in VMEM

    if row_vmem_bytes >= target_bytes or B == 1:
        # Tile the row axis within a single batch row.
        bt = 1
        if R <= sub:
            row_tile = R                                      # full dim: always legal
        else:
            row_tile = max(sub, (target_bytes // (W_vmem * itemsize)) // sub * sub)
            if row_tile >= R:
                row_tile = R
                if B == 1:
                    # Keep >= 2 row chunks so the "parallel" axis can feed both
                    # TensorCores on v7x.
                    half = _round_up((R + 1) // 2, sub)
                    if half < R:
                        row_tile = half
    else:
        # One flattened batch row is well under target: fold several batch rows
        # per block so small-S*D / large-B shapes don't pay per-step overhead.
        row_tile = R
        bt = min(B, max(1, target_bytes // row_vmem_bytes))
        while B % bt:                                         # keep batch blocks exact
            bt -= 1

    nrow = pl.cdiv(R, row_tile)   # last row block may be partial -> masked; fine
    nb = B // bt                  # bt divides B by construction

    # Double-buffered VMEM: x + out (bt rows) and pe (1 row) tiles, 2 buffers each.
    rt_vmem = _round_up(row_tile, sub)
    x_tile_vmem = bt * rt_vmem * W_vmem * itemsize
    pe_tile_vmem = rt_vmem * W_vmem * itemsize
    vmem_need = 4 * x_tile_vmem + 2 * pe_tile_vmem
    vmem_limit = int(min(max(vmem_need + (4 << 20), 32 << 20), 64 << 20))

    out3 = pl.pallas_call(
        _pos_enc_kernel,
        out_shape=jax.ShapeDtypeStruct((B, R, W), x.dtype),
        grid_spec=pltpu.PrefetchScalarGridSpec(
            num_scalar_prefetch=0,
            # Batch innermost: pe's block index is constant across the inner
            # batch steps, so pe is DMA'd once per row chunk.
            grid=(nrow, nb),
            in_specs=[
                pl.BlockSpec((bt, row_tile, W), lambda r, b: (b, r, 0)),
                pl.BlockSpec((row_tile, W), lambda r, b: (r, 0)),
            ],
            out_specs=pl.BlockSpec((bt, row_tile, W), lambda r, b: (b, r, 0)),
        ),
        compiler_params=pltpu.CompilerParams(
            dimension_semantics=("parallel", "arbitrary"),
            vmem_limit_bytes=vmem_limit,
        ),
    )(x3, pe2)

    return out3.reshape(B, S, D)


if __name__ == "__main__":
    key = jax.random.PRNGKey(0)

    # Small shapes consistent with the module: batch=2, seq=8, d_model=32.
    B, S, D = 2, 8, 32
    MAX_LEN = 64
    x = jax.random.normal(key, (B, S, D), dtype=jnp.float32)
    pe = make_positional_encoding_buffer(d_model=D, max_len=MAX_LEN)

    out = positional_encoding_forward(x, pe)
    out = jax.block_until_ready(out)
    ref = x + pe[:, :S, :]
    np.testing.assert_allclose(np.asarray(out), np.asarray(ref), rtol=1e-6, atol=1e-6)

    # Exercise the non-128-aligned fallback path (S*D not a multiple of 128).
    B2, S2, D2 = 2, 7, 10
    x2 = jax.random.normal(jax.random.PRNGKey(1), (B2, S2, D2), dtype=jnp.float32)
    pe2 = make_positional_encoding_buffer(d_model=D2, max_len=32)
    out2 = jax.block_until_ready(positional_encoding_forward(x2, pe2))
    ref2 = x2 + pe2[:, :S2, :]
    np.testing.assert_allclose(np.asarray(out2), np.asarray(ref2), rtol=1e-6, atol=1e-6)

    print("KERNEL_OK")
</pallas_src>

<mosaic_0001>
module attributes {stable_mosaic.version = 11 : i64} {
  func.func @_pos_enc_kernel(%arg0: i32, %arg1: i32, %arg2: memref<2x1x256xf32, #tpu.memory_space<vmem>>, %arg3: memref<1x256xf32, #tpu.memory_space<vmem>>, %arg4: memref<2x1x256xf32, #tpu.memory_space<vmem>>) attributes {dimension_semantics = [#tpu.dimension_semantics<parallel>, #tpu.dimension_semantics<arbitrary>], iteration_bounds = array<i64: 1, 1>, scalar_prefetch = 0 : i64, scratch_operands = 0 : i64, tpu.core_type = #tpu.core_type<tc>, window_params = [{transform_indices = @transform_0, window_bounds = array<i64: 2, 1, 256>}, {transform_indices = @transform_1, window_bounds = array<i64: 1, 256>}, {transform_indices = @transform_2, window_bounds = array<i64: 2, 1, 256>}]} {
    %c0 = arith.constant 0 : index
    %c0_0 = arith.constant 0 : index
    %c0_1 = arith.constant 0 : index
    %0 = vector.load %arg2[%c0, %c0_0, %c0_1] : memref<2x1x256xf32, #tpu.memory_space<vmem>>, vector<2x1x256xf32>
    %c0_2 = arith.constant 0 : index
    %c0_3 = arith.constant 0 : index
    %1 = vector.load %arg3[%c0_2, %c0_3] : memref<1x256xf32, #tpu.memory_space<vmem>>, vector<1x256xf32>
    %2 = vector.shape_cast %1 : vector<1x256xf32> to vector<1x1x256xf32>
    %3 = vector.broadcast %2 : vector<1x1x256xf32> to vector<2x1x256xf32>
    %4 = arith.addf %0, %3 : vector<2x1x256xf32>
    %c0_4 = arith.constant 0 : index
    %c0_5 = arith.constant 0 : index
    %c0_6 = arith.constant 0 : index
    %5 = vector.load %arg4[%c0_4, %c0_5, %c0_6] : memref<2x1x256xf32, #tpu.memory_space<vmem>>, vector<2x1x256xf32>
    tpu.vector_store %arg4[%c0_4, %c0_5, %c0_6], %4 {strides = array<i32>} : memref<2x1x256xf32, #tpu.memory_space<vmem>>, vector<2x1x256xf32>,
    return
  }
  func.func @transform_0(%arg0: i32, %arg1: i32) -> (i32, i32, i32) {
    %c0_i32 = arith.constant 0 : i32
    %c0_i32_0 = arith.constant 0 : i32
    return %arg1, %arg0, %c0_i32 : i32, i32, i32
  }
  func.func @transform_1(%arg0: i32, %arg1: i32) -> (i32, i32) {
    %c0_i32 = arith.constant 0 : i32
    %c0_i32_0 = arith.constant 0 : i32
    return %arg0, %c0_i32 : i32, i32
  }
  func.func @transform_2(%arg0: i32, %arg1: i32) -> (i32, i32, i32) {
    %c0_i32 = arith.constant 0 : i32
    %c0_i32_0 = arith.constant 0 : i32
    return %arg1, %arg0, %c0_i32 : i32, i32, i32
  }
}

</mosaic_0001>

<llo_original>
// kernel: tpu_custom_call.1
$region0: #{tpu_custom_call.1}
  #allocation0 [shape = 'u32[]', space=smem, size = 0x4, offset = 0x4, fixed_abs, tag = 'smem constant byte address 0x4 - core index']
  #allocation1 [shape = 'u32[144,128]{1,0:T(1,128)}', space=vmem, size = 0x12000, scoped, tag = 'internal scratch']
  %s0 = inlined_call_operand.hbm [shape: f32[2,1,256], index: 0, kind: input, shape index: {}]
  %s1 = inlined_call_operand.vmem [shape: f32[1,256], index: 1, kind: input, shape index: {}]
  %s2 = inlined_call_operand.hbm [shape: f32[2,1,256], index: 2, kind: output, shape index: {}]
  %s3 = sld [smem:[#allocation0]]
  $region22: #{tpu_custom_call.1} parent=0
    _
  %s5 = ssub.s32 1, %s3
  %s6 = scalar_select 0, %s5, %s3
  $region1: #{tpu_custom_call.1} parent=0
    #allocation2 [shape = 'u8[2048]{0}', space=vmem, size = 0x800, scoped, tag = 'input window, operand 0, single buffered']
    #allocation3 [shape = 's32[1]{0}', space=sflag, size = 0x4, scoped, tag = 'scoped memory for tpu_custom_call.1']
    #allocation4 [shape = 's32[1]{0}', space=sflag, size = 0x4, scoped, tag = 'scoped memory for tpu_custom_call.1']
    #allocation5 [shape = 'u8[2048]{0}', space=vmem, size = 0x800, scoped, tag = 'output window, operand 0, single buffered']
    %7 = vsyncpa [#allocation3], 0
    %8 = vsyncpa [#allocation4], 0
    // Predicated region
    $region2: #{tpu_custom_call.1} parent=1 // pred_check
      _
    $region3: #{tpu_custom_call.1} parent=1 // pred_check_branch
      %10 = sbr.rel (0) target = $region5
    $region4: #{tpu_custom_call.1} parent=1 // pred_region
      %s12 = ssub.s32 64, 64
      %13 = vsyncadd [#allocation3], %s12
      %s14 = sshll.u32 [#allocation2], 4
      %s15 = int_to_ptr.vmem [resolvable:$true] %s14
      %20 = dma.hbm_to_vmem [thread:$0]  %s0, 64, %s15, [#allocation3], 32, 32, 2
    $region5: #{tpu_custom_call.1} parent=1 // pred_fallthru
      _
    // Predicated region
    $region6: #{tpu_custom_call.1} parent=1 // pred_check
      _
    $region7: #{tpu_custom_call.1} parent=1 // pred_check_branch
      %22 = sbr.rel (0) target = $region9
    $region8: #{tpu_custom_call.1} parent=1 // pred_region
      _
    $region9: #{tpu_custom_call.1} parent=1 // pred_fallthru
      _
    // Predicated region
    $region10: #{tpu_custom_call.1} parent=1 // pred_check
      _
    $region11: #{tpu_custom_call.1} parent=1 // pred_check_branch
      %24 = sbr.rel (0) target = $region13
    $region12: #{tpu_custom_call.1} parent=1 // pred_region
      %25 = dma.done [#allocation3], 64
    $region13: #{tpu_custom_call.1} parent=1 // pred_fallthru
      _
    %v26 = vld [vmem:[#allocation2] sm:$0x3]
    %v27 = vld [vmem:[#allocation2 + $0x2] sm:$0x3]
    %v28 = vld [vmem:[%s1] sm:$0x3]
    %v29 = vadd.f32 %v26, %v28
    %v30 = vadd.f32 %v27, %v28
    %v31 = vlaneseq
    %vm32 = vcmp.ge.s32.totalorder %v31, 0
    %vm33 = vcmp.lt.s32.totalorder %v31, 256
    %vm34 = vmand %vm32, %vm33
    %35 = vst.msk [vmem:[#allocation5] sm:$0x3] %vm34, %v29
    %36 = vst.msk [vmem:[#allocation5 + $0x2] sm:$0x3] %vm34, %v30
    // Predicated region
    $region14: #{tpu_custom_call.1} parent=1 // pred_check
      _
    $region15: #{tpu_custom_call.1} parent=1 // pred_check_branch
      %38 = sbr.rel (0) target = $region17
    $region16: #{tpu_custom_call.1} parent=1 // pred_region
      %s40 = ssub.s32 64, 64
      %41 = vsyncadd [#allocation4], %s40
      %s42 = sshll.u32 [#allocation5], 4
      %s43 = int_to_ptr.vmem [resolvable:$true] %s42
      %48 = dma.vmem_to_hbm [thread:$0]  %s43, 64, %s2, [#allocation4], 32, 32, 2
    $region17: #{tpu_custom_call.1} parent=1 // pred_fallthru
      _
    // Predicated region
    $region18: #{tpu_custom_call.1} parent=1 // pred_check
      _
    $region19: #{tpu_custom_call.1} parent=1 // pred_check_branch
      %50 = sbr.rel (0) target = $region21
    $region20: #{tpu_custom_call.1} parent=1 // pred_region
      %51 = dma.done [#allocation4], 64
    $region21: #{tpu_custom_call.1} parent=1 // pred_fallthru
      _
    %52 = vsyncpa [#allocation3], 1
    %53 = vsyncpa [#allocation4], 1

</llo_original>
